<compile_context>
chip_gen: v7x
topology: tpu7x:2x2x1
jax: 0.10.0
libtpu: 0.0.40
codegen_flags: <defaults>
</compile_context>

<pallas_src>
import functools

import jax
import jax.numpy as jnp
import numpy as np
from jax.experimental import pallas as pl
from jax.experimental.pallas import tpu as pltpu

FEAT = 64
GROUP_ROWS = 24  # ln_1 normalizes over (24, 64)


def _fused_ln_kernel(x_ref, y_ref, wb_ref, xo_ref, yo_ref, zo_ref,
                     *, eps0, eps1):
    # x_ref: (xr, 64)   y_ref: (g, 24, 64)   wb_ref: (2, 64) = [weight; bias]
    w = wb_ref[0:1, :].astype(jnp.float32)   # (1, 64)
    b = wb_ref[1:2, :].astype(jnp.float32)   # (1, 64)

    def ln_last(v):
        # LayerNorm over the last dim, biased variance, two-pass centered form.
        m = jnp.mean(v, axis=-1, keepdims=True)
        d = v - m
        var = jnp.mean(d * d, axis=-1, keepdims=True)
        return d * jax.lax.rsqrt(var + eps0) * w + b

    # ln_0(x)
    x = x_ref[...].astype(jnp.float32)
    xo_ref[...] = ln_last(x).astype(xo_ref.dtype)

    # ln_0(y) -- keep the normalized value in VMEM for ln_1.
    y = y_ref[...].astype(jnp.float32)
    yn = ln_last(y)                                   # (g, 24, 64)
    yo_ref[...] = yn.astype(yo_ref.dtype)

    # ln_1(yn): normalize over the whole (24, 64) group, no affine.
    gm = jnp.mean(jnp.mean(yn, axis=-1, keepdims=True),
                  axis=-2, keepdims=True)             # (g, 1, 1)
    gd = yn - gm
    gv = jnp.mean(jnp.mean(gd * gd, axis=-1, keepdims=True),
                  axis=-2, keepdims=True)             # (g, 1, 1)
    zo_ref[...] = (gd * jax.lax.rsqrt(gv + eps1)).astype(zo_ref.dtype)


def model_forward(x, y, ln0_weight, ln0_bias, eps0=1e-5, eps1=0.01,
                  num_splits=1):
    x_shape = x.shape
    y_shape = y.shape
    assert x_shape[-1] == FEAT and y_shape[-1] == FEAT
    assert y_shape[-2] == GROUP_ROWS

    x_rows = int(np.prod(x_shape[:-1]))
    groups = int(np.prod(y_shape[:-2]))

    x2 = x.reshape(x_rows, FEAT)
    y3 = y.reshape(groups, GROUP_ROWS, FEAT)
    wb = jnp.concatenate(
        [ln0_weight.reshape(1, FEAT), ln0_bias.reshape(1, FEAT)], axis=0)

    kernel = functools.partial(_fused_ln_kernel, eps0=eps0, eps1=eps1)
    out_shape = (
        jax.ShapeDtypeStruct((x_rows, FEAT), x.dtype),
        jax.ShapeDtypeStruct((groups, GROUP_ROWS, FEAT), y.dtype),
        jax.ShapeDtypeStruct((groups, GROUP_ROWS, FEAT), y.dtype),
    )

    # Pick the largest split (<= num_splits) that keeps blocks aligned;
    # splits == 1 (whole-array, grid-less call) is the default and always works.
    splits = max(1, num_splits)
    while splits > 1 and not (
        x_rows % splits == 0
        and groups % splits == 0
        and (x_rows // splits) % 8 == 0
    ):
        splits -= 1

    if splits == 1:
        # Grid-less call: whole arrays resident in VMEM, no pipelining /
        # grid bookkeeping.  This is the fast path on all generations.
        xo, yo, zo = pl.pallas_call(
            kernel,
            out_shape=out_shape,
            in_specs=[
                pl.BlockSpec(memory_space=pltpu.MemorySpace.VMEM),
                pl.BlockSpec(memory_space=pltpu.MemorySpace.VMEM),
                pl.BlockSpec(memory_space=pltpu.MemorySpace.VMEM),
            ],
            out_specs=(
                pl.BlockSpec(memory_space=pltpu.MemorySpace.VMEM),
                pl.BlockSpec(memory_space=pltpu.MemorySpace.VMEM),
                pl.BlockSpec(memory_space=pltpu.MemorySpace.VMEM),
            ),
        )(x2, y3, wb)
    else:
        # Optional multi-TensorCore split (benchmark before enabling on v7x).
        xr_blk = x_rows // splits
        g_blk = groups // splits
        xo, yo, zo = pl.pallas_call(
            kernel,
            out_shape=out_shape,
            grid_spec=pltpu.PrefetchScalarGridSpec(
                num_scalar_prefetch=0,
                grid=(splits,),
                in_specs=[
                    pl.BlockSpec((xr_blk, FEAT), lambda i: (i, 0)),
                    pl.BlockSpec((g_blk, GROUP_ROWS, FEAT),
                                 lambda i: (i, 0, 0)),
                    pl.BlockSpec((2, FEAT), lambda i: (0, 0)),
                ],
                out_specs=(
                    pl.BlockSpec((xr_blk, FEAT), lambda i: (i, 0)),
                    pl.BlockSpec((g_blk, GROUP_ROWS, FEAT),
                                 lambda i: (i, 0, 0)),
                    pl.BlockSpec((g_blk, GROUP_ROWS, FEAT),
                                 lambda i: (i, 0, 0)),
                ),
            ),
            compiler_params=pltpu.CompilerParams(
                dimension_semantics=("parallel",)),
        )(x2, y3, wb)

    return xo.reshape(x_shape), yo.reshape(y_shape), zo.reshape(y_shape)


def _ref_forward(x, y, w, b):
    def ln_last(v):
        m = jnp.mean(v, axis=-1, keepdims=True)
        var = jnp.mean((v - m) ** 2, axis=-1, keepdims=True)
        return (v - m) / jnp.sqrt(var + 1e-5) * w + b

    def ln2d(v):
        m = jnp.mean(v, axis=(-2, -1), keepdims=True)
        var = jnp.mean((v - m) ** 2, axis=(-2, -1), keepdims=True)
        return (v - m) / jnp.sqrt(var + 0.01)

    xo = ln_last(x)
    yo = ln_last(y)
    zo = ln2d(yo)
    return xo, yo, zo


if __name__ == "__main__":
    key = jax.random.PRNGKey(0)
    k1, k2, k3, k4 = jax.random.split(key, 4)

    # Shapes consistent with the module: ln_0 over last dim 64,
    # ln_1 over last two dims (24, 64) of y.
    x = jax.random.normal(k1, (2, 24, 64), dtype=jnp.float32)
    y = jax.random.normal(k2, (2, 3, 24, 64), dtype=jnp.float32)

    # Deterministic "parameters" (module used torch.rand -> uniform [0, 1)).
    ln0_weight = jax.random.uniform(k3, (64,), dtype=jnp.float32)
    ln0_bias = jax.random.uniform(k4, (64,), dtype=jnp.float32)

    xo, yo, zo = model_forward(x, y, ln0_weight, ln0_bias)
    jax.block_until_ready((xo, yo, zo))

    # Correctness check against a pure-JAX reference.
    xr, yr, zr = _ref_forward(x, y, ln0_weight, ln0_bias)
    np.testing.assert_allclose(np.asarray(xo), np.asarray(xr), atol=2e-5, rtol=2e-5)
    np.testing.assert_allclose(np.asarray(yo), np.asarray(yr), atol=2e-5, rtol=2e-5)
    np.testing.assert_allclose(np.asarray(zo), np.asarray(zr), atol=2e-5, rtol=2e-5)

    print("KERNEL_OK")
</pallas_src>

<mosaic_0001>
module attributes {stable_mosaic.version = 11 : i64} {
  func.func @_fused_ln_kernel(%arg0: memref<48x64xf32, #tpu.memory_space<vmem>>, %arg1: memref<6x24x64xf32, #tpu.memory_space<vmem>>, %arg2: memref<2x64xf32, #tpu.memory_space<vmem>>, %arg3: memref<48x64xf32, #tpu.memory_space<vmem>>, %arg4: memref<6x24x64xf32, #tpu.memory_space<vmem>>, %arg5: memref<6x24x64xf32, #tpu.memory_space<vmem>>) attributes {dimension_semantics = [], scalar_prefetch = 0 : i64, scratch_operands = 0 : i64, tpu.core_type = #tpu.core_type<tc>} {
    %c0 = arith.constant 0 : index
    %c0_0 = arith.constant 0 : index
    %0 = vector.load %arg2[%c0, %c0_0] : memref<2x64xf32, #tpu.memory_space<vmem>>, vector<1x64xf32>
    %c1 = arith.constant 1 : index
    %c0_1 = arith.constant 0 : index
    %1 = vector.load %arg2[%c1, %c0_1] : memref<2x64xf32, #tpu.memory_space<vmem>>, vector<1x64xf32>
    %c0_2 = arith.constant 0 : index
    %c0_3 = arith.constant 0 : index
    %2 = vector.load %arg0[%c0_2, %c0_3] : memref<48x64xf32, #tpu.memory_space<vmem>>, vector<48x64xf32>
    %cst = arith.constant dense<0.000000e+00> : vector<48xf32>
    %3 = vector.multi_reduction <add>, %2, %cst [1] : vector<48x64xf32> to vector<48xf32>
    %4 = vector.shape_cast %3 : vector<48xf32> to vector<48x1xf32>
    %cst_4 = arith.constant 6.400000e+01 : f32
    %5 = vector.broadcast %cst_4 : f32 to vector<48x1xf32>
    %6 = arith.divf %4, %5 : vector<48x1xf32>
    %7 = vector.broadcast %6 : vector<48x1xf32> to vector<48x64xf32>
    %8 = arith.subf %2, %7 : vector<48x64xf32>
    %9 = arith.mulf %8, %8 : vector<48x64xf32>
    %cst_5 = arith.constant dense<0.000000e+00> : vector<48xf32>
    %10 = vector.multi_reduction <add>, %9, %cst_5 [1] : vector<48x64xf32> to vector<48xf32>
    %11 = vector.shape_cast %10 : vector<48xf32> to vector<48x1xf32>
    %cst_6 = arith.constant 6.400000e+01 : f32
    %12 = vector.broadcast %cst_6 : f32 to vector<48x1xf32>
    %13 = arith.divf %11, %12 : vector<48x1xf32>
    %cst_7 = arith.constant 9.99999974E-6 : f32
    %14 = vector.broadcast %cst_7 : f32 to vector<48x1xf32>
    %15 = arith.addf %13, %14 : vector<48x1xf32>
    %16 = math.rsqrt %15 : vector<48x1xf32>
    %17 = vector.broadcast %16 : vector<48x1xf32> to vector<48x64xf32>
    %18 = arith.mulf %8, %17 : vector<48x64xf32>
    %19 = vector.broadcast %0 : vector<1x64xf32> to vector<48x64xf32>
    %20 = arith.mulf %18, %19 : vector<48x64xf32>
    %21 = vector.broadcast %1 : vector<1x64xf32> to vector<48x64xf32>
    %22 = arith.addf %20, %21 : vector<48x64xf32>
    %c0_8 = arith.constant 0 : index
    %c0_9 = arith.constant 0 : index
    %23 = vector.load %arg3[%c0_8, %c0_9] : memref<48x64xf32, #tpu.memory_space<vmem>>, vector<48x64xf32>
    tpu.vector_store %arg3[%c0_8, %c0_9], %22 {strides = array<i32>} : memref<48x64xf32, #tpu.memory_space<vmem>>, vector<48x64xf32>,
    %c0_10 = arith.constant 0 : index
    %c0_11 = arith.constant 0 : index
    %c0_12 = arith.constant 0 : index
    %24 = vector.load %arg1[%c0_10, %c0_11, %c0_12] : memref<6x24x64xf32, #tpu.memory_space<vmem>>, vector<6x24x64xf32>
    %cst_13 = arith.constant dense<0.000000e+00> : vector<6x24xf32>
    %25 = vector.multi_reduction <add>, %24, %cst_13 [2] : vector<6x24x64xf32> to vector<6x24xf32>
    %26 = vector.shape_cast %25 : vector<6x24xf32> to vector<6x24x1xf32>
    %cst_14 = arith.constant 6.400000e+01 : f32
    %27 = vector.broadcast %cst_14 : f32 to vector<6x24x1xf32>
    %28 = arith.divf %26, %27 : vector<6x24x1xf32>
    %29 = vector.broadcast %28 : vector<6x24x1xf32> to vector<6x24x64xf32>
    %30 = arith.subf %24, %29 : vector<6x24x64xf32>
    %31 = arith.mulf %30, %30 : vector<6x24x64xf32>
    %cst_15 = arith.constant dense<0.000000e+00> : vector<6x24xf32>
    %32 = vector.multi_reduction <add>, %31, %cst_15 [2] : vector<6x24x64xf32> to vector<6x24xf32>
    %33 = vector.shape_cast %32 : vector<6x24xf32> to vector<6x24x1xf32>
    %cst_16 = arith.constant 6.400000e+01 : f32
    %34 = vector.broadcast %cst_16 : f32 to vector<6x24x1xf32>
    %35 = arith.divf %33, %34 : vector<6x24x1xf32>
    %cst_17 = arith.constant 9.99999974E-6 : f32
    %36 = vector.broadcast %cst_17 : f32 to vector<6x24x1xf32>
    %37 = arith.addf %35, %36 : vector<6x24x1xf32>
    %38 = math.rsqrt %37 : vector<6x24x1xf32>
    %39 = vector.broadcast %38 : vector<6x24x1xf32> to vector<6x24x64xf32>
    %40 = arith.mulf %30, %39 : vector<6x24x64xf32>
    %41 = vector.shape_cast %0 : vector<1x64xf32> to vector<1x1x64xf32>
    %42 = vector.broadcast %41 : vector<1x1x64xf32> to vector<6x24x64xf32>
    %43 = arith.mulf %40, %42 : vector<6x24x64xf32>
    %44 = vector.shape_cast %1 : vector<1x64xf32> to vector<1x1x64xf32>
    %45 = vector.broadcast %44 : vector<1x1x64xf32> to vector<6x24x64xf32>
    %46 = arith.addf %43, %45 : vector<6x24x64xf32>
    %c0_18 = arith.constant 0 : index
    %c0_19 = arith.constant 0 : index
    %c0_20 = arith.constant 0 : index
    %47 = vector.load %arg4[%c0_18, %c0_19, %c0_20] : memref<6x24x64xf32, #tpu.memory_space<vmem>>, vector<6x24x64xf32>
    tpu.vector_store %arg4[%c0_18, %c0_19, %c0_20], %46 {strides = array<i32>} : memref<6x24x64xf32, #tpu.memory_space<vmem>>, vector<6x24x64xf32>,
    %cst_21 = arith.constant dense<0.000000e+00> : vector<6x24xf32>
    %48 = vector.multi_reduction <add>, %46, %cst_21 [2] : vector<6x24x64xf32> to vector<6x24xf32>
    %49 = vector.shape_cast %48 : vector<6x24xf32> to vector<6x24x1xf32>
    %cst_22 = arith.constant 6.400000e+01 : f32
    %50 = vector.broadcast %cst_22 : f32 to vector<6x24x1xf32>
    %51 = arith.divf %49, %50 : vector<6x24x1xf32>
    %cst_23 = arith.constant dense<0.000000e+00> : vector<6x1xf32>
    %52 = vector.multi_reduction <add>, %51, %cst_23 [1] : vector<6x24x1xf32> to vector<6x1xf32>
    %53 = vector.shape_cast %52 : vector<6x1xf32> to vector<6x1x1xf32>
    %cst_24 = arith.constant 2.400000e+01 : f32
    %54 = vector.broadcast %cst_24 : f32 to vector<6x1x1xf32>
    %55 = arith.divf %53, %54 : vector<6x1x1xf32>
    %56 = vector.broadcast %55 : vector<6x1x1xf32> to vector<6x24x64xf32>
    %57 = arith.subf %46, %56 : vector<6x24x64xf32>
    %58 = arith.mulf %57, %57 : vector<6x24x64xf32>
    %cst_25 = arith.constant dense<0.000000e+00> : vector<6x24xf32>
    %59 = vector.multi_reduction <add>, %58, %cst_25 [2] : vector<6x24x64xf32> to vector<6x24xf32>
    %60 = vector.shape_cast %59 : vector<6x24xf32> to vector<6x24x1xf32>
    %cst_26 = arith.constant 6.400000e+01 : f32
    %61 = vector.broadcast %cst_26 : f32 to vector<6x24x1xf32>
    %62 = arith.divf %60, %61 : vector<6x24x1xf32>
    %cst_27 = arith.constant dense<0.000000e+00> : vector<6x1xf32>
    %63 = vector.multi_reduction <add>, %62, %cst_27 [1] : vector<6x24x1xf32> to vector<6x1xf32>
    %64 = vector.shape_cast %63 : vector<6x1xf32> to vector<6x1x1xf32>
    %cst_28 = arith.constant 2.400000e+01 : f32
    %65 = vector.broadcast %cst_28 : f32 to vector<6x1x1xf32>
    %66 = arith.divf %64, %65 : vector<6x1x1xf32>
    %cst_29 = arith.constant 0.00999999977 : f32
    %67 = vector.broadcast %cst_29 : f32 to vector<6x1x1xf32>
    %68 = arith.addf %66, %67 : vector<6x1x1xf32>
    %69 = math.rsqrt %68 : vector<6x1x1xf32>
    %70 = vector.broadcast %69 : vector<6x1x1xf32> to vector<6x24x64xf32>
    %71 = arith.mulf %57, %70 : vector<6x24x64xf32>
    %c0_30 = arith.constant 0 : index
    %c0_31 = arith.constant 0 : index
    %c0_32 = arith.constant 0 : index
    %72 = vector.load %arg5[%c0_30, %c0_31, %c0_32] : memref<6x24x64xf32, #tpu.memory_space<vmem>>, vector<6x24x64xf32>
    tpu.vector_store %arg5[%c0_30, %c0_31, %c0_32], %71 {strides = array<i32>} : memref<6x24x64xf32, #tpu.memory_space<vmem>>, vector<6x24x64xf32>,
    return
  }
}

</mosaic_0001>

<llo_original>
// kernel: tpu_custom_call.1
$region0: #{tpu_custom_call.1}
  #allocation0 [shape = 'u32[]', space=smem, size = 0x4, offset = 0x4, fixed_abs, tag = 'smem constant byte address 0x4 - core index']
  #allocation1 [shape = 'u32[144,128]{1,0:T(1,128)}', space=vmem, size = 0x12000, scoped, tag = 'internal scratch']
  %s0 = inlined_call_operand.hbm [shape: f32[48,64], index: 0, kind: input, shape index: {}]
  %s1 = inlined_call_operand.hbm [shape: f32[6,24,64], index: 1, kind: input, shape index: {}]
  %s2 = inlined_call_operand.vmem [shape: f32[2,64], index: 2, kind: input, shape index: {}]
  %s3 = inlined_call_operand.hbm [shape: f32[48,64], index: 3, kind: output, shape index: {0}]
  %s4 = inlined_call_operand.hbm [shape: f32[6,24,64], index: 4, kind: output, shape index: {1}]
  %s5 = inlined_call_operand.hbm [shape: f32[6,24,64], index: 5, kind: output, shape index: {2}]
  %6 = xla_tuple %s3, %s4, %s5
  %s7 = sld [smem:[#allocation0]]
  $region46: #{tpu_custom_call.1} parent=0
    _
  %s9 = ssub.s32 1, %s7
  %s10 = scalar_select 0, %s9, %s7
  $region1: #{tpu_custom_call.1} parent=0
    #allocation2 [shape = 'u8[24576]{0}', space=vmem, size = 0x6000, scoped, tag = 'input window, operand 0, single buffered']
    #allocation3 [shape = 's32[1]{0}', space=sflag, size = 0x4, scoped, tag = 'scoped memory for tpu_custom_call.1']
    #allocation4 [shape = 's32[1]{0}', space=sflag, size = 0x4, scoped, tag = 'scoped memory for tpu_custom_call.1']
    #allocation5 [shape = 'u8[73728]{0}', space=vmem, size = 0x12000, scoped, tag = 'input window, operand 1, single buffered']
    #allocation6 [shape = 's32[1]{0}', space=sflag, size = 0x4, scoped, tag = 'scoped memory for tpu_custom_call.1']
    #allocation7 [shape = 'u8[24576]{0}', space=vmem, size = 0x6000, scoped, tag = 'output window, operand 0, single buffered']
    #allocation8 [shape = 'u8[73728]{0}', space=vmem, size = 0x12000, scoped, tag = 'output window, operand 1, single buffered']
    #allocation9 [shape = 's32[1]{0}', space=sflag, size = 0x4, scoped, tag = 'scoped memory for tpu_custom_call.1']
    #allocation10 [shape = 'u8[73728]{0}', space=vmem, size = 0x12000, scoped, tag = 'output window, operand 2, single buffered']
    %11 = vsyncpa [#allocation3], 0
    %12 = vsyncpa [#allocation6], 0
    %13 = vsyncpa [#allocation4], 0
    %14 = vsyncpa [#allocation9], 0
    // Predicated region
    $region2: #{tpu_custom_call.1} parent=1 // pred_check
      _
    $region3: #{tpu_custom_call.1} parent=1 // pred_check_branch
      %16 = sbr.rel (0) target = $region5
    $region4: #{tpu_custom_call.1} parent=1 // pred_region
      %s18 = ssub.s32 768, 768
      %19 = vsyncadd [#allocation3], %s18
      %s20 = sshll.u32 [#allocation2], 4
      %s21 = int_to_ptr.vmem [resolvable:$true] %s20
      %26 = dma.hbm_to_vmem [thread:$0]  %s0, 768, %s21, [#allocation3], 128, 128, 8
    $region5: #{tpu_custom_call.1} parent=1 // pred_fallthru
      _
    // Predicated region
    $region6: #{tpu_custom_call.1} parent=1 // pred_check
      _
    $region7: #{tpu_custom_call.1} parent=1 // pred_check_branch
      %28 = sbr.rel (0) target = $region9
    $region8: #{tpu_custom_call.1} parent=1 // pred_region
      %s30 = ssub.s32 2304, 2304
      %31 = vsyncadd [#allocation6], %s30
      %s32 = sshll.u32 [#allocation5], 4
      %s33 = int_to_ptr.vmem [resolvable:$true] %s32
      %38 = dma.hbm_to_vmem [thread:$0]  %s1, 2304, %s33, [#allocation6], 128, 128, 8
    $region9: #{tpu_custom_call.1} parent=1 // pred_fallthru
      _
    // Predicated region
    $region10: #{tpu_custom_call.1} parent=1 // pred_check
      _
    $region11: #{tpu_custom_call.1} parent=1 // pred_check_branch
      %40 = sbr.rel (0) target = $region13
    $region12: #{tpu_custom_call.1} parent=1 // pred_region
      _
    $region13: #{tpu_custom_call.1} parent=1 // pred_fallthru
      _
    // Predicated region
    $region14: #{tpu_custom_call.1} parent=1 // pred_check
      _
    $region15: #{tpu_custom_call.1} parent=1 // pred_check_branch
      %42 = sbr.rel (0) target = $region17
    $region16: #{tpu_custom_call.1} parent=1 // pred_region
      %43 = dma.done [#allocation3], 768
    $region17: #{tpu_custom_call.1} parent=1 // pred_fallthru
      _
    // Predicated region
    $region18: #{tpu_custom_call.1} parent=1 // pred_check
      _
    $region19: #{tpu_custom_call.1} parent=1 // pred_check_branch
      %45 = sbr.rel (0) target = $region21
    $region20: #{tpu_custom_call.1} parent=1 // pred_region
      %46 = dma.done [#allocation6], 2304
    $region21: #{tpu_custom_call.1} parent=1 // pred_fallthru
      _
    %v47 = vld [vmem:[%s2] sm:$0x1]
    %v48 = vld [vmem:[%s2 + $0x1] sm:$0x1]
    %v49 = vld [vmem:[#allocation2] sm:$0xff]
    %v50 = vld [vmem:[#allocation2 + $0x8] sm:$0xff]
    %v51 = vld [vmem:[#allocation2 + $0x10] sm:$0xff]
    %v52 = vld [vmem:[#allocation2 + $0x18] sm:$0xff]
    %v53 = vld [vmem:[#allocation2 + $0x20] sm:$0xff]
    %v54 = vld [vmem:[#allocation2 + $0x28] sm:$0xff]
    %vm55 = vcmask 523264
    %v56 = vsel %vm55, %v49, 0.0
    %57 = vadd.xlane.f32.xlu0 %v56
    %v58 = vpop.xlane.xlu0 %57
    %v59 = vsel %vm55, %v50, 0.0
    %60 = vadd.xlane.f32.xlu0 %v59
    %v61 = vpop.xlane.xlu0 %60
    %v62 = vsel %vm55, %v51, 0.0
    %63 = vadd.xlane.f32.xlu0 %v62
    %v64 = vpop.xlane.xlu0 %63
    %v65 = vsel %vm55, %v52, 0.0
    %66 = vadd.xlane.f32.xlu0 %v65
    %v67 = vpop.xlane.xlu0 %66
    %v68 = vsel %vm55, %v53, 0.0
    %69 = vadd.xlane.f32.xlu0 %v68
    %v70 = vpop.xlane.xlu0 %69
    %v71 = vsel %vm55, %v54, 0.0
    %72 = vadd.xlane.f32.xlu0 %v71
    %v73 = vpop.xlane.xlu0 %72
    %v74 = vrcp.pop 64.0
    %v75 = vmul.f32 %v58, %v74
    %v76 = vmul.f32 %v61, %v74
    %v77 = vmul.f32 %v64, %v74
    %v78 = vmul.f32 %v67, %v74
    %v79 = vmul.f32 %v70, %v74
    %v80 = vmul.f32 %v73, %v74
    %v81 = vsub.f32 %v49, %v75
    %v82 = vsub.f32 %v50, %v76
    %v83 = vsub.f32 %v51, %v77
    %v84 = vsub.f32 %v52, %v78
    %v85 = vsub.f32 %v53, %v79
    %v86 = vsub.f32 %v54, %v80
    %v87 = vmul.f32 %v81, %v81
    %v88 = vmul.f32 %v82, %v82
    %v89 = vmul.f32 %v83, %v83
    %v90 = vmul.f32 %v84, %v84
    %v91 = vmul.f32 %v85, %v85
    %v92 = vmul.f32 %v86, %v86
    %v93 = vsel %vm55, %v87, 0.0
    %94 = vadd.xlane.f32.xlu0 %v93
    %v95 = vpop.xlane.xlu0 %94
    %v96 = vsel %vm55, %v88, 0.0
    %97 = vadd.xlane.f32.xlu0 %v96
    %v98 = vpop.xlane.xlu0 %97
    %v99 = vsel %vm55, %v89, 0.0
    %100 = vadd.xlane.f32.xlu0 %v99
    %v101 = vpop.xlane.xlu0 %100
    %v102 = vsel %vm55, %v90, 0.0
    %103 = vadd.xlane.f32.xlu0 %v102
    %v104 = vpop.xlane.xlu0 %103
    %v105 = vsel %vm55, %v91, 0.0
    %106 = vadd.xlane.f32.xlu0 %v105
    %v107 = vpop.xlane.xlu0 %106
    %v108 = vsel %vm55, %v92, 0.0
    %109 = vadd.xlane.f32.xlu0 %v108
    %v110 = vpop.xlane.xlu0 %109
    %v111 = vmul.f32 %v95, %v74
    %v112 = vmul.f32 %v98, %v74
    %v113 = vmul.f32 %v101, %v74
    %v114 = vmul.f32 %v104, %v74
    %v115 = vmul.f32 %v107, %v74
    %v116 = vmul.f32 %v110, %v74
    %v117 = vadd.f32 %v111, 1e-05
    %v118 = vadd.f32 %v112, 1e-05
    %v119 = vadd.f32 %v113, 1e-05
    %v120 = vadd.f32 %v114, 1e-05
    %v121 = vadd.f32 %v115, 1e-05
    %v122 = vadd.f32 %v116, 1e-05
    %v123 = vrsqrt.pop %v117
    %v124 = vrsqrt.pop %v118
    %v125 = vrsqrt.pop %v119
    %v126 = vrsqrt.pop %v120
    %v127 = vrsqrt.pop %v121
    %v128 = vrsqrt.pop %v122
    %v129 = vmul.f32 %v81, %v123
    %v130 = vmul.f32 %v82, %v124
    %v131 = vmul.f32 %v83, %v125
    %v132 = vmul.f32 %v84, %v126
    %v133 = vmul.f32 %v85, %v127
    %v134 = vmul.f32 %v86, %v128
    %v135 = vlaneseq
    %v136 = vshrl.u32 %v135, 7
    %v137 = vsub.s32 0, %v136
    %v138 = vrot.slane %v47, %v137
    %v139 = vmul.f32 %v129, %v138
    %v140 = vmul.f32 %v130, %v138
    %v141 = vmul.f32 %v131, %v138
    %v142 = vmul.f32 %v132, %v138
    %v143 = vmul.f32 %v133, %v138
    %v144 = vmul.f32 %v134, %v138
    %v145 = vlaneseq
    %v146 = vshrl.u32 %v145, 7
    %v147 = vsub.s32 0, %v146
    %v148 = vrot.slane %v48, %v147
    %v149 = vadd.f32 %v139, %v148
    %v150 = vadd.f32 %v140, %v148
    %v151 = vadd.f32 %v141, %v148
    %v152 = vadd.f32 %v142, %v148
    %v153 = vadd.f32 %v143, %v148
    %v154 = vadd.f32 %v144, %v148
    %155 = vst.msk [vmem:[#allocation7] sm:$0xff] %vm55, %v149
    %156 = vst.msk [vmem:[#allocation7 + $0x8] sm:$0xff] %vm55, %v150
    %157 = vst.msk [vmem:[#allocation7 + $0x10] sm:$0xff] %vm55, %v151
    %158 = vst.msk [vmem:[#allocation7 + $0x18] sm:$0xff] %vm55, %v152
    %159 = vst.msk [vmem:[#allocation7 + $0x20] sm:$0xff] %vm55, %v153
    %160 = vst.msk [vmem:[#allocation7 + $0x28] sm:$0xff] %vm55, %v154
    %v161 = vld [vmem:[#allocation5] sm:$0xff]
    %v162 = vld [vmem:[#allocation5 + $0x8] sm:$0xff]
    %v163 = vld [vmem:[#allocation5 + $0x10] sm:$0xff]
    %v164 = vld [vmem:[#allocation5 + $0x18] sm:$0xff]
    %v165 = vld [vmem:[#allocation5 + $0x20] sm:$0xff]
    %v166 = vld [vmem:[#allocation5 + $0x28] sm:$0xff]
    %v167 = vld [vmem:[#allocation5 + $0x30] sm:$0xff]
    %v168 = vld [vmem:[#allocation5 + $0x38] sm:$0xff]
    %v169 = vld [vmem:[#allocation5 + $0x40] sm:$0xff]
    %v170 = vld [vmem:[#allocation5 + $0x48] sm:$0xff]
    %v171 = vld [vmem:[#allocation5 + $0x50] sm:$0xff]
    %v172 = vld [vmem:[#allocation5 + $0x58] sm:$0xff]
    %v173 = vld [vmem:[#allocation5 + $0x60] sm:$0xff]
    %v174 = vld [vmem:[#allocation5 + $0x68] sm:$0xff]
    %v175 = vld [vmem:[#allocation5 + $0x70] sm:$0xff]
    %v176 = vld [vmem:[#allocation5 + $0x78] sm:$0xff]
    %v177 = vld [vmem:[#allocation5 + $0x80] sm:$0xff]
    %v178 = vld [vmem:[#allocation5 + $0x88] sm:$0xff]
    %v179 = vsel %vm55, %v161, 0.0
    %180 = vadd.xlane.f32.xlu0 %v179
    %v181 = vpop.xlane.xlu0 %180
    %v182 = vsel %vm55, %v162, 0.0
    %183 = vadd.xlane.f32.xlu0 %v182
    %v184 = vpop.xlane.xlu0 %183
    %v185 = vsel %vm55, %v163, 0.0
    %186 = vadd.xlane.f32.xlu0 %v185
    %v187 = vpop.xlane.xlu0 %186
    %v188 = vsel %vm55, %v164, 0.0
    %189 = vadd.xlane.f32.xlu0 %v188
    %v190 = vpop.xlane.xlu0 %189
    %v191 = vsel %vm55, %v165, 0.0
    %192 = vadd.xlane.f32.xlu0 %v191
    %v193 = vpop.xlane.xlu0 %192
    %v194 = vsel %vm55, %v166, 0.0
    %195 = vadd.xlane.f32.xlu0 %v194
    %v196 = vpop.xlane.xlu0 %195
    %v197 = vsel %vm55, %v167, 0.0
    %198 = vadd.xlane.f32.xlu0 %v197
    %v199 = vpop.xlane.xlu0 %198
    %v200 = vsel %vm55, %v168, 0.0
    %201 = vadd.xlane.f32.xlu0 %v200
    %v202 = vpop.xlane.xlu0 %201
    %v203 = vsel %vm55, %v169, 0.0
    %204 = vadd.xlane.f32.xlu0 %v203
    %v205 = vpop.xlane.xlu0 %204
    %v206 = vsel %vm55, %v170, 0.0
    %207 = vadd.xlane.f32.xlu0 %v206
    %v208 = vpop.xlane.xlu0 %207
    %v209 = vsel %vm55, %v171, 0.0
    %210 = vadd.xlane.f32.xlu0 %v209
    %v211 = vpop.xlane.xlu0 %210
    %v212 = vsel %vm55, %v172, 0.0
    %213 = vadd.xlane.f32.xlu0 %v212
    %v214 = vpop.xlane.xlu0 %213
    %v215 = vsel %vm55, %v173, 0.0
    %216 = vadd.xlane.f32.xlu0 %v215
    %v217 = vpop.xlane.xlu0 %216
    %v218 = vsel %vm55, %v174, 0.0
    %219 = vadd.xlane.f32.xlu0 %v218
    %v220 = vpop.xlane.xlu0 %219
    %v221 = vsel %vm55, %v175, 0.0
    %222 = vadd.xlane.f32.xlu0 %v221
    %v223 = vpop.xlane.xlu0 %222
    %v224 = vsel %vm55, %v176, 0.0
    %225 = vadd.xlane.f32.xlu0 %v224
    %v226 = vpop.xlane.xlu0 %225
    %v227 = vsel %vm55, %v177, 0.0
    %228 = vadd.xlane.f32.xlu0 %v227
    %v229 = vpop.xlane.xlu0 %228
    %v230 = vsel %vm55, %v178, 0.0
    %231 = vadd.xlane.f32.xlu0 %v230
    %v232 = vpop.xlane.xlu0 %231
    %v233 = vmul.f32 %v181, %v74
    %v234 = vmul.f32 %v184, %v74
    %v235 = vmul.f32 %v187, %v74
    %v236 = vmul.f32 %v190, %v74
    %v237 = vmul.f32 %v193, %v74
    %v238 = vmul.f32 %v196, %v74
    %v239 = vmul.f32 %v199, %v74
    %v240 = vmul.f32 %v202, %v74
    %v241 = vmul.f32 %v205, %v74
    %v242 = vmul.f32 %v208, %v74
    %v243 = vmul.f32 %v211, %v74
    %v244 = vmul.f32 %v214, %v74
    %v245 = vmul.f32 %v217, %v74
    %v246 = vmul.f32 %v220, %v74
    %v247 = vmul.f32 %v223, %v74
    %v248 = vmul.f32 %v226, %v74
    %v249 = vmul.f32 %v229, %v74
    %v250 = vmul.f32 %v232, %v74
    %v251 = vsub.f32 %v161, %v233
    %v252 = vsub.f32 %v162, %v234
    %v253 = vsub.f32 %v163, %v235
    %v254 = vsub.f32 %v164, %v236
    %v255 = vsub.f32 %v165, %v237
    %v256 = vsub.f32 %v166, %v238
    %v257 = vsub.f32 %v167, %v239
    %v258 = vsub.f32 %v168, %v240
    %v259 = vsub.f32 %v169, %v241
    %v260 = vsub.f32 %v170, %v242
    %v261 = vsub.f32 %v171, %v243
    %v262 = vsub.f32 %v172, %v244
    %v263 = vsub.f32 %v173, %v245
    %v264 = vsub.f32 %v174, %v246
    %v265 = vsub.f32 %v175, %v247
    %v266 = vsub.f32 %v176, %v248
    %v267 = vsub.f32 %v177, %v249
    %v268 = vsub.f32 %v178, %v250
    %v269 = vmul.f32 %v251, %v251
    %v270 = vmul.f32 %v252, %v252
    %v271 = vmul.f32 %v253, %v253
    %v272 = vmul.f32 %v254, %v254
    %v273 = vmul.f32 %v255, %v255
    %v274 = vmul.f32 %v256, %v256
    %v275 = vmul.f32 %v257, %v257
    %v276 = vmul.f32 %v258, %v258
    %v277 = vmul.f32 %v259, %v259
    %v278 = vmul.f32 %v260, %v260
    %v279 = vmul.f32 %v261, %v261
    %v280 = vmul.f32 %v262, %v262
    %v281 = vmul.f32 %v263, %v263
    %v282 = vmul.f32 %v264, %v264
    %v283 = vmul.f32 %v265, %v265
    %v284 = vmul.f32 %v266, %v266
    %v285 = vmul.f32 %v267, %v267
    %v286 = vmul.f32 %v268, %v268
    %v287 = vsel %vm55, %v269, 0.0
    %288 = vadd.xlane.f32.xlu0 %v287
    %v289 = vpop.xlane.xlu0 %288
    %v290 = vsel %vm55, %v270, 0.0
    %291 = vadd.xlane.f32.xlu0 %v290
    %v292 = vpop.xlane.xlu0 %291
    %v293 = vsel %vm55, %v271, 0.0
    %294 = vadd.xlane.f32.xlu0 %v293
    %v295 = vpop.xlane.xlu0 %294
    %v296 = vsel %vm55, %v272, 0.0
    %297 = vadd.xlane.f32.xlu0 %v296
    %v298 = vpop.xlane.xlu0 %297
    %v299 = vsel %vm55, %v273, 0.0
    %300 = vadd.xlane.f32.xlu0 %v299
    %v301 = vpop.xlane.xlu0 %300
    %v302 = vsel %vm55, %v274, 0.0
    %303 = vadd.xlane.f32.xlu0 %v302
    %v304 = vpop.xlane.xlu0 %303
    %v305 = vsel %vm55, %v275, 0.0
    %306 = vadd.xlane.f32.xlu0 %v305
    %v307 = vpop.xlane.xlu0 %306
    %v308 = vsel %vm55, %v276, 0.0
    %309 = vadd.xlane.f32.xlu0 %v308
    %v310 = vpop.xlane.xlu0 %309
    %v311 = vsel %vm55, %v277, 0.0
    %312 = vadd.xlane.f32.xlu0 %v311
    %v313 = vpop.xlane.xlu0 %312
    %v314 = vsel %vm55, %v278, 0.0
    %315 = vadd.xlane.f32.xlu0 %v314
    %v316 = vpop.xlane.xlu0 %315
    %v317 = vsel %vm55, %v279, 0.0
    %318 = vadd.xlane.f32.xlu0 %v317
    %v319 = vpop.xlane.xlu0 %318
    %v320 = vsel %vm55, %v280, 0.0
    %321 = vadd.xlane.f32.xlu0 %v320
    %v322 = vpop.xlane.xlu0 %321
    %v323 = vsel %vm55, %v281, 0.0
    %324 = vadd.xlane.f32.xlu0 %v323
    %v325 = vpop.xlane.xlu0 %324
    %v326 = vsel %vm55, %v282, 0.0
    %327 = vadd.xlane.f32.xlu0 %v326
    %v328 = vpop.xlane.xlu0 %327
    %v329 = vsel %vm55, %v283, 0.0
    %330 = vadd.xlane.f32.xlu0 %v329
    %v331 = vpop.xlane.xlu0 %330
    %v332 = vsel %vm55, %v284, 0.0
    %333 = vadd.xlane.f32.xlu0 %v332
    %v334 = vpop.xlane.xlu0 %333
    %v335 = vsel %vm55, %v285, 0.0
    %336 = vadd.xlane.f32.xlu0 %v335
    %v337 = vpop.xlane.xlu0 %336
    %v338 = vsel %vm55, %v286, 0.0
    %339 = vadd.xlane.f32.xlu0 %v338
    %v340 = vpop.xlane.xlu0 %339
    %v341 = vmul.f32 %v289, %v74
    %v342 = vmul.f32 %v292, %v74
    %v343 = vmul.f32 %v295, %v74
    %v344 = vmul.f32 %v298, %v74
    %v345 = vmul.f32 %v301, %v74
    %v346 = vmul.f32 %v304, %v74
    %v347 = vmul.f32 %v307, %v74
    %v348 = vmul.f32 %v310, %v74
    %v349 = vmul.f32 %v313, %v74
    %v350 = vmul.f32 %v316, %v74
    %v351 = vmul.f32 %v319, %v74
    %v352 = vmul.f32 %v322, %v74
    %v353 = vmul.f32 %v325, %v74
    %v354 = vmul.f32 %v328, %v74
    %v355 = vmul.f32 %v331, %v74
    %v356 = vmul.f32 %v334, %v74
    %v357 = vmul.f32 %v337, %v74
    %v358 = vmul.f32 %v340, %v74
    %v359 = vadd.f32 %v341, 1e-05
    %v360 = vadd.f32 %v342, 1e-05
    %v361 = vadd.f32 %v343, 1e-05
    %v362 = vadd.f32 %v344, 1e-05
    %v363 = vadd.f32 %v345, 1e-05
    %v364 = vadd.f32 %v346, 1e-05
    %v365 = vadd.f32 %v347, 1e-05
    %v366 = vadd.f32 %v348, 1e-05
    %v367 = vadd.f32 %v349, 1e-05
    %v368 = vadd.f32 %v350, 1e-05
    %v369 = vadd.f32 %v351, 1e-05
    %v370 = vadd.f32 %v352, 1e-05
    %v371 = vadd.f32 %v353, 1e-05
    %v372 = vadd.f32 %v354, 1e-05
    %v373 = vadd.f32 %v355, 1e-05
    %v374 = vadd.f32 %v356, 1e-05
    %v375 = vadd.f32 %v357, 1e-05
    %v376 = vadd.f32 %v358, 1e-05
    %v377 = vrsqrt.pop %v359
    %v378 = vrsqrt.pop %v360
    %v379 = vrsqrt.pop %v361
    %v380 = vrsqrt.pop %v362
    %v381 = vrsqrt.pop %v363
    %v382 = vrsqrt.pop %v364
    %v383 = vrsqrt.pop %v365
    %v384 = vrsqrt.pop %v366
    %v385 = vrsqrt.pop %v367
    %v386 = vrsqrt.pop %v368
    %v387 = vrsqrt.pop %v369
    %v388 = vrsqrt.pop %v370
    %v389 = vrsqrt.pop %v371
    %v390 = vrsqrt.pop %v372
    %v391 = vrsqrt.pop %v373
    %v392 = vrsqrt.pop %v374
    %v393 = vrsqrt.pop %v375
    %v394 = vrsqrt.pop %v376
    %v395 = vmul.f32 %v251, %v377
    %v396 = vmul.f32 %v252, %v378
    %v397 = vmul.f32 %v253, %v379
    %v398 = vmul.f32 %v254, %v380
    %v399 = vmul.f32 %v255, %v381
    %v400 = vmul.f32 %v256, %v382
    %v401 = vmul.f32 %v257, %v383
    %v402 = vmul.f32 %v258, %v384
    %v403 = vmul.f32 %v259, %v385
    %v404 = vmul.f32 %v260, %v386
    %v405 = vmul.f32 %v261, %v387
    %v406 = vmul.f32 %v262, %v388
    %v407 = vmul.f32 %v263, %v389
    %v408 = vmul.f32 %v264, %v390
    %v409 = vmul.f32 %v265, %v391
    %v410 = vmul.f32 %v266, %v392
    %v411 = vmul.f32 %v267, %v393
    %v412 = vmul.f32 %v268, %v394
    %v413 = vmul.f32 %v395, %v138
    %v414 = vmul.f32 %v396, %v138
    %v415 = vmul.f32 %v397, %v138
    %v416 = vmul.f32 %v398, %v138
    %v417 = vmul.f32 %v399, %v138
    %v418 = vmul.f32 %v400, %v138
    %v419 = vmul.f32 %v401, %v138
    %v420 = vmul.f32 %v402, %v138
    %v421 = vmul.f32 %v403, %v138
    %v422 = vmul.f32 %v404, %v138
    %v423 = vmul.f32 %v405, %v138
    %v424 = vmul.f32 %v406, %v138
    %v425 = vmul.f32 %v407, %v138
    %v426 = vmul.f32 %v408, %v138
    %v427 = vmul.f32 %v409, %v138
    %v428 = vmul.f32 %v410, %v138
    %v429 = vmul.f32 %v411, %v138
    %v430 = vmul.f32 %v412, %v138
    %v431 = vadd.f32 %v413, %v148
    %v432 = vadd.f32 %v414, %v148
    %v433 = vadd.f32 %v415, %v148
    %v434 = vadd.f32 %v416, %v148
    %v435 = vadd.f32 %v417, %v148
    %v436 = vadd.f32 %v418, %v148
    %v437 = vadd.f32 %v419, %v148
    %v438 = vadd.f32 %v420, %v148
    %v439 = vadd.f32 %v421, %v148
    %v440 = vadd.f32 %v422, %v148
    %v441 = vadd.f32 %v423, %v148
    %v442 = vadd.f32 %v424, %v148
    %v443 = vadd.f32 %v425, %v148
    %v444 = vadd.f32 %v426, %v148
    %v445 = vadd.f32 %v427, %v148
    %v446 = vadd.f32 %v428, %v148
    %v447 = vadd.f32 %v429, %v148
    %v448 = vadd.f32 %v430, %v148
    %449 = vst.msk [vmem:[#allocation8] sm:$0xff] %vm55, %v431
    %450 = vst.msk [vmem:[#allocation8 + $0x8] sm:$0xff] %vm55, %v432
    %451 = vst.msk [vmem:[#allocation8 + $0x10] sm:$0xff] %vm55, %v433
    %452 = vst.msk [vmem:[#allocation8 + $0x18] sm:$0xff] %vm55, %v434
    %453 = vst.msk [vmem:[#allocation8 + $0x20] sm:$0xff] %vm55, %v435
    %454 = vst.msk [vmem:[#allocation8 + $0x28] sm:$0xff] %vm55, %v436
    %455 = vst.msk [vmem:[#allocation8 + $0x30] sm:$0xff] %vm55, %v437
    %456 = vst.msk [vmem:[#allocation8 + $0x38] sm:$0xff] %vm55, %v438
    %457 = vst.msk [vmem:[#allocation8 + $0x40] sm:$0xff] %vm55, %v439
    %458 = vst.msk [vmem:[#allocation8 + $0x48] sm:$0xff] %vm55, %v440
    %459 = vst.msk [vmem:[#allocation8 + $0x50] sm:$0xff] %vm55, %v441
    %460 = vst.msk [vmem:[#allocation8 + $0x58] sm:$0xff] %vm55, %v442
    %461 = vst.msk [vmem:[#allocation8 + $0x60] sm:$0xff] %vm55, %v443
    %462 = vst.msk [vmem:[#allocation8 + $0x68] sm:$0xff] %vm55, %v444
    %463 = vst.msk [vmem:[#allocation8 + $0x70] sm:$0xff] %vm55, %v445
    %464 = vst.msk [vmem:[#allocation8 + $0x78] sm:$0xff] %vm55, %v446
    %465 = vst.msk [vmem:[#allocation8 + $0x80] sm:$0xff] %vm55, %v447
    %466 = vst.msk [vmem:[#allocation8 + $0x88] sm:$0xff] %vm55, %v448
    %v467 = vsel %vm55, %v431, 0.0
    %468 = vadd.xlane.f32.xlu0 %v467
    %v469 = vpop.xlane.xlu0 %468
    %v470 = vsel %vm55, %v432, 0.0
    %471 = vadd.xlane.f32.xlu0 %v470
    %v472 = vpop.xlane.xlu0 %471
    %v473 = vsel %vm55, %v433, 0.0
    %474 = vadd.xlane.f32.xlu0 %v473
    %v475 = vpop.xlane.xlu0 %474
    %v476 = vsel %vm55, %v434, 0.0
    %477 = vadd.xlane.f32.xlu0 %v476
    %v478 = vpop.xlane.xlu0 %477
    %v479 = vsel %vm55, %v435, 0.0
    %480 = vadd.xlane.f32.xlu0 %v479
    %v481 = vpop.xlane.xlu0 %480
    %v482 = vsel %vm55, %v436, 0.0
    %483 = vadd.xlane.f32.xlu0 %v482
    %v484 = vpop.xlane.xlu0 %483
    %v485 = vsel %vm55, %v437, 0.0
    %486 = vadd.xlane.f32.xlu0 %v485
    %v487 = vpop.xlane.xlu0 %486
    %v488 = vsel %vm55, %v438, 0.0
    %489 = vadd.xlane.f32.xlu0 %v488
    %v490 = vpop.xlane.xlu0 %489
    %v491 = vsel %vm55, %v439, 0.0
    %492 = vadd.xlane.f32.xlu0 %v491
    %v493 = vpop.xlane.xlu0 %492
    %v494 = vsel %vm55, %v440, 0.0
    %495 = vadd.xlane.f32.xlu0 %v494
    %v496 = vpop.xlane.xlu0 %495
    %v497 = vsel %vm55, %v441, 0.0
    %498 = vadd.xlane.f32.xlu0 %v497
    %v499 = vpop.xlane.xlu0 %498
    %v500 = vsel %vm55, %v442, 0.0
    %501 = vadd.xlane.f32.xlu0 %v500
    %v502 = vpop.xlane.xlu0 %501
    %v503 = vsel %vm55, %v443, 0.0
    %504 = vadd.xlane.f32.xlu0 %v503
    %v505 = vpop.xlane.xlu0 %504
    %v506 = vsel %vm55, %v444, 0.0
    %507 = vadd.xlane.f32.xlu0 %v506
    %v508 = vpop.xlane.xlu0 %507
    %v509 = vsel %vm55, %v445, 0.0
    %510 = vadd.xlane.f32.xlu0 %v509
    %v511 = vpop.xlane.xlu0 %510
    %v512 = vsel %vm55, %v446, 0.0
    %513 = vadd.xlane.f32.xlu0 %v512
    %v514 = vpop.xlane.xlu0 %513
    %v515 = vsel %vm55, %v447, 0.0
    %516 = vadd.xlane.f32.xlu0 %v515
    %v517 = vpop.xlane.xlu0 %516
    %v518 = vsel %vm55, %v448, 0.0
    %519 = vadd.xlane.f32.xlu0 %v518
    %v520 = vpop.xlane.xlu0 %519
    %v521 = vmul.f32 %v469, %v74
    %v522 = vmul.f32 %v472, %v74
    %v523 = vmul.f32 %v475, %v74
    %v524 = vmul.f32 %v478, %v74
    %v525 = vmul.f32 %v481, %v74
    %v526 = vmul.f32 %v484, %v74
    %v527 = vmul.f32 %v487, %v74
    %v528 = vmul.f32 %v490, %v74
    %v529 = vmul.f32 %v493, %v74
    %v530 = vmul.f32 %v496, %v74
    %v531 = vmul.f32 %v499, %v74
    %v532 = vmul.f32 %v502, %v74
    %v533 = vmul.f32 %v505, %v74
    %v534 = vmul.f32 %v508, %v74
    %v535 = vmul.f32 %v511, %v74
    %v536 = vmul.f32 %v514, %v74
    %v537 = vmul.f32 %v517, %v74
    %v538 = vmul.f32 %v520, %v74
    %v539 = vadd.f32 %v521, %v522
    %v540 = vadd.f32 %v539, %v523
    %v541 = vrot.slane %v540, 4
    %v542 = vadd.f32 %v540, %v541
    %v543 = vrot.slane %v542, 2
    %v544 = vadd.f32 %v542, %v543
    %v545 = vrot.slane %v544, 1
    %v546 = vadd.f32 %v544, %v545
    %v547 = vadd.f32 %v524, %v525
    %v548 = vadd.f32 %v547, %v526
    %v549 = vrot.slane %v548, 4
    %v550 = vadd.f32 %v548, %v549
    %v551 = vrot.slane %v550, 2
    %v552 = vadd.f32 %v550, %v551
    %v553 = vrot.slane %v552, 1
    %v554 = vadd.f32 %v552, %v553
    %v555 = vadd.f32 %v527, %v528
    %v556 = vadd.f32 %v555, %v529
    %v557 = vrot.slane %v556, 4
    %v558 = vadd.f32 %v556, %v557
    %v559 = vrot.slane %v558, 2
    %v560 = vadd.f32 %v558, %v559
    %v561 = vrot.slane %v560, 1
    %v562 = vadd.f32 %v560, %v561
    %v563 = vadd.f32 %v530, %v531
    %v564 = vadd.f32 %v563, %v532
    %v565 = vrot.slane %v564, 4
    %v566 = vadd.f32 %v564, %v565
    %v567 = vrot.slane %v566, 2
    %v568 = vadd.f32 %v566, %v567
    %v569 = vrot.slane %v568, 1
    %v570 = vadd.f32 %v568, %v569
    %v571 = vadd.f32 %v533, %v534
    %v572 = vadd.f32 %v571, %v535
    %v573 = vrot.slane %v572, 4
    %v574 = vadd.f32 %v572, %v573
    %v575 = vrot.slane %v574, 2
    %v576 = vadd.f32 %v574, %v575
    %v577 = vrot.slane %v576, 1
    %v578 = vadd.f32 %v576, %v577
    %v579 = vadd.f32 %v536, %v537
    %v580 = vadd.f32 %v579, %v538
    %v581 = vrot.slane %v580, 4
    %v582 = vadd.f32 %v580, %v581
    %v583 = vrot.slane %v582, 2
    %v584 = vadd.f32 %v582, %v583
    %v585 = vrot.slane %v584, 1
    %v586 = vadd.f32 %v584, %v585
    %v587 = vrcp.pop 24.0
    %v588 = vmul.f32 %v546, %v587
    %v589 = vmul.f32 %v554, %v587
    %v590 = vmul.f32 %v562, %v587
    %v591 = vmul.f32 %v570, %v587
    %v592 = vmul.f32 %v578, %v587
    %v593 = vmul.f32 %v586, %v587
    %v594 = vsub.f32 %v431, %v588
    %v595 = vsub.f32 %v432, %v588
    %v596 = vsub.f32 %v433, %v588
    %v597 = vsub.f32 %v434, %v589
    %v598 = vsub.f32 %v435, %v589
    %v599 = vsub.f32 %v436, %v589
    %v600 = vsub.f32 %v437, %v590
    %v601 = vsub.f32 %v438, %v590
    %v602 = vsub.f32 %v439, %v590
    %v603 = vsub.f32 %v440, %v591
    %v604 = vsub.f32 %v441, %v591
    %v605 = vsub.f32 %v442, %v591
    %v606 = vsub.f32 %v443, %v592
    %v607 = vsub.f32 %v444, %v592
    %v608 = vsub.f32 %v445, %v592
    %v609 = vsub.f32 %v446, %v593
    %v610 = vsub.f32 %v447, %v593
    %v611 = vsub.f32 %v448, %v593
    %v612 = vmul.f32 %v594, %v594
    %v613 = vmul.f32 %v595, %v595
    %v614 = vmul.f32 %v596, %v596
    %v615 = vmul.f32 %v597, %v597
    %v616 = vmul.f32 %v598, %v598
    %v617 = vmul.f32 %v599, %v599
    %v618 = vmul.f32 %v600, %v600
    %v619 = vmul.f32 %v601, %v601
    %v620 = vmul.f32 %v602, %v602
    %v621 = vmul.f32 %v603, %v603
    %v622 = vmul.f32 %v604, %v604
    %v623 = vmul.f32 %v605, %v605
    %v624 = vmul.f32 %v606, %v606
    %v625 = vmul.f32 %v607, %v607
    %v626 = vmul.f32 %v608, %v608
    %v627 = vmul.f32 %v609, %v609
    %v628 = vmul.f32 %v610, %v610
    %v629 = vmul.f32 %v611, %v611
    %v630 = vsel %vm55, %v612, 0.0
    %631 = vadd.xlane.f32.xlu0 %v630
    %v632 = vpop.xlane.xlu0 %631
    %v633 = vsel %vm55, %v613, 0.0
    %634 = vadd.xlane.f32.xlu0 %v633
    %v635 = vpop.xlane.xlu0 %634
    %v636 = vsel %vm55, %v614, 0.0
    %637 = vadd.xlane.f32.xlu0 %v636
    %v638 = vpop.xlane.xlu0 %637
    %v639 = vsel %vm55, %v615, 0.0
    %640 = vadd.xlane.f32.xlu0 %v639
    %v641 = vpop.xlane.xlu0 %640
    %v642 = vsel %vm55, %v616, 0.0
    %643 = vadd.xlane.f32.xlu0 %v642
    %v644 = vpop.xlane.xlu0 %643
    %v645 = vsel %vm55, %v617, 0.0
    %646 = vadd.xlane.f32.xlu0 %v645
    %v647 = vpop.xlane.xlu0 %646
    %v648 = vsel %vm55, %v618, 0.0
    %649 = vadd.xlane.f32.xlu0 %v648
    %v650 = vpop.xlane.xlu0 %649
    %v651 = vsel %vm55, %v619, 0.0
    %652 = vadd.xlane.f32.xlu0 %v651
    %v653 = vpop.xlane.xlu0 %652
    %v654 = vsel %vm55, %v620, 0.0
    %655 = vadd.xlane.f32.xlu0 %v654
    %v656 = vpop.xlane.xlu0 %655
    %v657 = vsel %vm55, %v621, 0.0
    %658 = vadd.xlane.f32.xlu0 %v657
    %v659 = vpop.xlane.xlu0 %658
    %v660 = vsel %vm55, %v622, 0.0
    %661 = vadd.xlane.f32.xlu0 %v660
    %v662 = vpop.xlane.xlu0 %661
    %v663 = vsel %vm55, %v623, 0.0
    %664 = vadd.xlane.f32.xlu0 %v663
    %v665 = vpop.xlane.xlu0 %664
    %v666 = vsel %vm55, %v624, 0.0
    %667 = vadd.xlane.f32.xlu0 %v666
    %v668 = vpop.xlane.xlu0 %667
    %v669 = vsel %vm55, %v625, 0.0
    %670 = vadd.xlane.f32.xlu0 %v669
    %v671 = vpop.xlane.xlu0 %670
    %v672 = vsel %vm55, %v626, 0.0
    %673 = vadd.xlane.f32.xlu0 %v672
    %v674 = vpop.xlane.xlu0 %673
    %v675 = vsel %vm55, %v627, 0.0
    %676 = vadd.xlane.f32.xlu0 %v675
    %v677 = vpop.xlane.xlu0 %676
    %v678 = vsel %vm55, %v628, 0.0
    %679 = vadd.xlane.f32.xlu0 %v678
    %v680 = vpop.xlane.xlu0 %679
    %v681 = vsel %vm55, %v629, 0.0
    %682 = vadd.xlane.f32.xlu0 %v681
    %v683 = vpop.xlane.xlu0 %682
    %v684 = vmul.f32 %v632, %v74
    %v685 = vmul.f32 %v635, %v74
    %v686 = vmul.f32 %v638, %v74
    %v687 = vmul.f32 %v641, %v74
    %v688 = vmul.f32 %v644, %v74
    %v689 = vmul.f32 %v647, %v74
    %v690 = vmul.f32 %v650, %v74
    %v691 = vmul.f32 %v653, %v74
    %v692 = vmul.f32 %v656, %v74
    %v693 = vmul.f32 %v659, %v74
    %v694 = vmul.f32 %v662, %v74
    %v695 = vmul.f32 %v665, %v74
    %v696 = vmul.f32 %v668, %v74
    %v697 = vmul.f32 %v671, %v74
    %v698 = vmul.f32 %v674, %v74
    %v699 = vmul.f32 %v677, %v74
    %v700 = vmul.f32 %v680, %v74
    %v701 = vmul.f32 %v683, %v74
    %v702 = vadd.f32 %v684, %v685
    %v703 = vadd.f32 %v702, %v686
    %v704 = vrot.slane %v703, 4
    %v705 = vadd.f32 %v703, %v704
    %v706 = vrot.slane %v705, 2
    %v707 = vadd.f32 %v705, %v706
    %v708 = vrot.slane %v707, 1
    %v709 = vadd.f32 %v707, %v708
    %v710 = vadd.f32 %v687, %v688
    %v711 = vadd.f32 %v710, %v689
    %v712 = vrot.slane %v711, 4
    %v713 = vadd.f32 %v711, %v712
    %v714 = vrot.slane %v713, 2
    %v715 = vadd.f32 %v713, %v714
    %v716 = vrot.slane %v715, 1
    %v717 = vadd.f32 %v715, %v716
    %v718 = vadd.f32 %v690, %v691
    %v719 = vadd.f32 %v718, %v692
    %v720 = vrot.slane %v719, 4
    %v721 = vadd.f32 %v719, %v720
    %v722 = vrot.slane %v721, 2
    %v723 = vadd.f32 %v721, %v722
    %v724 = vrot.slane %v723, 1
    %v725 = vadd.f32 %v723, %v724
    %v726 = vadd.f32 %v693, %v694
    %v727 = vadd.f32 %v726, %v695
    %v728 = vrot.slane %v727, 4
    %v729 = vadd.f32 %v727, %v728
    %v730 = vrot.slane %v729, 2
    %v731 = vadd.f32 %v729, %v730
    %v732 = vrot.slane %v731, 1
    %v733 = vadd.f32 %v731, %v732
    %v734 = vadd.f32 %v696, %v697
    %v735 = vadd.f32 %v734, %v698
    %v736 = vrot.slane %v735, 4
    %v737 = vadd.f32 %v735, %v736
    %v738 = vrot.slane %v737, 2
    %v739 = vadd.f32 %v737, %v738
    %v740 = vrot.slane %v739, 1
    %v741 = vadd.f32 %v739, %v740
    %v742 = vadd.f32 %v699, %v700
    %v743 = vadd.f32 %v742, %v701
    %v744 = vrot.slane %v743, 4
    %v745 = vadd.f32 %v743, %v744
    %v746 = vrot.slane %v745, 2
    %v747 = vadd.f32 %v745, %v746
    %v748 = vrot.slane %v747, 1
    %v749 = vadd.f32 %v747, %v748
    %v750 = vmul.f32 %v709, %v587
    %v751 = vmul.f32 %v717, %v587
    %v752 = vmul.f32 %v725, %v587
    %v753 = vmul.f32 %v733, %v587
    %v754 = vmul.f32 %v741, %v587
    %v755 = vmul.f32 %v749, %v587
    %v756 = vadd.f32 %v750, 0.01
    %v757 = vadd.f32 %v751, 0.01
    %v758 = vadd.f32 %v752, 0.01
    %v759 = vadd.f32 %v753, 0.01
    %v760 = vadd.f32 %v754, 0.01
    %v761 = vadd.f32 %v755, 0.01
    %v762 = vrsqrt.pop %v756
    %v763 = vrsqrt.pop %v757
    %v764 = vrsqrt.pop %v758
    %v765 = vrsqrt.pop %v759
    %v766 = vrsqrt.pop %v760
    %v767 = vrsqrt.pop %v761
    %v768 = vmul.f32 %v594, %v762
    %v769 = vmul.f32 %v595, %v762
    %v770 = vmul.f32 %v596, %v762
    %v771 = vmul.f32 %v597, %v763
    %v772 = vmul.f32 %v598, %v763
    %v773 = vmul.f32 %v599, %v763
    %v774 = vmul.f32 %v600, %v764
    %v775 = vmul.f32 %v601, %v764
    %v776 = vmul.f32 %v602, %v764
    %v777 = vmul.f32 %v603, %v765
    %v778 = vmul.f32 %v604, %v765
    %v779 = vmul.f32 %v605, %v765
    %v780 = vmul.f32 %v606, %v766
    %v781 = vmul.f32 %v607, %v766
    %v782 = vmul.f32 %v608, %v766
    %v783 = vmul.f32 %v609, %v767
    %v784 = vmul.f32 %v610, %v767
    %v785 = vmul.f32 %v611, %v767
    %786 = vst.msk [vmem:[#allocation10] sm:$0xff] %vm55, %v768
    %787 = vst.msk [vmem:[#allocation10 + $0x8] sm:$0xff] %vm55, %v769
    %788 = vst.msk [vmem:[#allocation10 + $0x10] sm:$0xff] %vm55, %v770
    %789 = vst.msk [vmem:[#allocation10 + $0x18] sm:$0xff] %vm55, %v771
    %790 = vst.msk [vmem:[#allocation10 + $0x20] sm:$0xff] %vm55, %v772
    %791 = vst.msk [vmem:[#allocation10 + $0x28] sm:$0xff] %vm55, %v773
    %792 = vst.msk [vmem:[#allocation10 + $0x30] sm:$0xff] %vm55, %v774
    %793 = vst.msk [vmem:[#allocation10 + $0x38] sm:$0xff] %vm55, %v775
    %794 = vst.msk [vmem:[#allocation10 + $0x40] sm:$0xff] %vm55, %v776
    %795 = vst.msk [vmem:[#allocation10 + $0x48] sm:$0xff] %vm55, %v777
    %796 = vst.msk [vmem:[#allocation10 + $0x50] sm:$0xff] %vm55, %v778
    %797 = vst.msk [vmem:[#allocation10 + $0x58] sm:$0xff] %vm55, %v779
    %798 = vst.msk [vmem:[#allocation10 + $0x60] sm:$0xff] %vm55, %v780
    %799 = vst.msk [vmem:[#allocation10 + $0x68] sm:$0xff] %vm55, %v781
    %800 = vst.msk [vmem:[#allocation10 + $0x70] sm:$0xff] %vm55, %v782
    %801 = vst.msk [vmem:[#allocation10 + $0x78] sm:$0xff] %vm55, %v783
    %802 = vst.msk [vmem:[#allocation10 + $0x80] sm:$0xff] %vm55, %v784
    %803 = vst.msk [vmem:[#allocation10 + $0x88] sm:$0xff] %vm55, %v785
    // Predicated region
    $region22: #{tpu_custom_call.1} parent=1 // pred_check
      _
    $region23: #{tpu_custom_call.1} parent=1 // pred_check_branch
      %805 = sbr.rel (0) target = $region25
    $region24: #{tpu_custom_call.1} parent=1 // pred_region
      %s807 = ssub.s32 768, 768
      %808 = vsyncadd [#allocation4], %s807
      %s809 = sshll.u32 [#allocation7], 4
      %s810 = int_to_ptr.vmem [resolvable:$true] %s809
      %815 = dma.vmem_to_hbm [thread:$0]  %s810, 768, %s3, [#allocation4], 128, 128, 8
    $region25: #{tpu_custom_call.1} parent=1 // pred_fallthru
      _
    // Predicated region
    $region26: #{tpu_custom_call.1} parent=1 // pred_check
      _
    $region27: #{tpu_custom_call.1} parent=1 // pred_check_branch
      %817 = sbr.rel (0) target = $region29
    $region28: #{tpu_custom_call.1} parent=1 // pred_region
      %s819 = ssub.s32 2304, 2304
      %820 = vsyncadd [#allocation9], %s819
      %s821 = sshll.u32 [#allocation8], 4
      %s822 = int_to_ptr.vmem [resolvable:$true] %s821
      %827 = dma.vmem_to_hbm [thread:$0]  %s822, 2304, %s4, [#allocation9], 128, 128, 8
    $region29: #{tpu_custom_call.1} parent=1 // pred_fallthru
      _
    // Predicated region
    $region30: #{tpu_custom_call.1} parent=1 // pred_check
      _
    $region31: #{tpu_custom_call.1} parent=1 // pred_check_branch
      %829 = sbr.rel (0) target = $region33
    $region32: #{tpu_custom_call.1} parent=1 // pred_region
      %s831 = ssub.s32 2304, 2304
      %832 = vsyncadd [#allocation9], %s831
      %s833 = sshll.u32 [#allocation10], 4
      %s834 = int_to_ptr.vmem [resolvable:$true] %s833
      %839 = dma.vmem_to_hbm [thread:$0]  %s834, 2304, %s5, [#allocation9], 128, 128, 8
    $region33: #{tpu_custom_call.1} parent=1 // pred_fallthru
      _
    // Predicated region
    $region34: #{tpu_custom_call.1} parent=1 // pred_check
      _
    $region35: #{tpu_custom_call.1} parent=1 // pred_check_branch
      %841 = sbr.rel (0) target = $region37
    $region36: #{tpu_custom_call.1} parent=1 // pred_region
      %842 = dma.done [#allocation4], 768
    $region37: #{tpu_custom_call.1} parent=1 // pred_fallthru
      _
    // Predicated region
    $region38: #{tpu_custom_call.1} parent=1 // pred_check
      _
    $region39: #{tpu_custom_call.1} parent=1 // pred_check_branch
      %844 = sbr.rel (0) target = $region41
    $region40: #{tpu_custom_call.1} parent=1 // pred_region
      %845 = dma.done [#allocation9], 2304
    $region41: #{tpu_custom_call.1} parent=1 // pred_fallthru
      _
    // Predicated region
    $region42: #{tpu_custom_call.1} parent=1 // pred_check
      _
    $region43: #{tpu_custom_call.1} parent=1 // pred_check_branch
      %847 = sbr.rel (0) target = $region45
    $region44: #{tpu_custom_call.1} parent=1 // pred_region
      %848 = dma.done [#allocation9], 2304
    $region45: #{tpu_custom_call.1} parent=1 // pred_fallthru
      _
    %849 = vsyncpa [#allocation3], 1
    %850 = vsyncpa [#allocation6], 1
    %851 = vsyncpa [#allocation4], 1
    %852 = vsyncpa [#allocation9], 1

</llo_original>
